<compile_context>
chip_gen: v7x
topology: tpu7x:2x2x1
jax: 0.10.0
libtpu: 0.0.40
codegen_flags: <defaults>
</compile_context>

<pallas_src>
import jax
import jax.numpy as jnp
import numpy as np
from jax.experimental import pallas as pl
from jax.experimental.pallas import tpu as pltpu


_BLUR_TAPS = {
    1: [1.0],
    2: [1.0, 1.0],
    3: [1.0, 2.0, 1.0],
    4: [1.0, 3.0, 3.0, 1.0],
    5: [1.0, 4.0, 6.0, 4.0, 1.0],
    6: [1.0, 5.0, 10.0, 10.0, 5.0, 1.0],
    7: [1.0, 6.0, 15.0, 20.0, 15.0, 6.0, 1.0],
}


def blur_kernel_2d(size: int) -> np.ndarray:
    k = np.asarray(_BLUR_TAPS[size], dtype=np.float32)
    k2 = np.outer(k, k)
    return k2 / k2.sum()


def _polyphase_plan(K: int, factor: int = 2):
    """Trace-time tap plan for zero-insert x2 upsample + KxK blur (upfirdn).

    Returns (pad, hoff, vtaps):
      pad   : spatial padding applied to the compact input on each side,
      hoff  : {lane_offset: [coef_even_col, coef_odd_col]} for the horizontal
              pass over the column-duplicated padded input,
      vtaps : {row_parity: [(row_offset_in_h, coef), ...]} for the vertical pass.
    """
    assert factor == 2
    k = np.asarray(_BLUR_TAPS[K], dtype=np.float64)
    kk = k * float(factor) / k.sum()               # separable 1-D taps incl. gain
    pad0 = (K - factor + 1) // 2 + factor - 1      # as in UpFirDn2D.__init__
    taps = {0: [], 1: []}                          # output parity -> [(c, w)]
    for q in (0, 1):
        for d in range(K):
            if (q + d - pad0) % 2:
                continue
            taps[q].append(((q + d - pad0) // 2, float(kk[d])))
    all_c = [c for q in (0, 1) for (c, _) in taps[q]]
    pad = max([0] + [-c for c in all_c] + list(all_c))
    hoff = {}
    for q in (0, 1):
        for c, w in taps[q]:
            cw = hoff.setdefault(2 * (c + pad), [0.0, 0.0])
            cw[q] += w
    vtaps = {q: [(c + pad, w) for (c, w) in taps[q]] for q in (0, 1)}
    return pad, hoff, vtaps


def _make_upfirdn2x_kernel(hoff, vtaps, H, W):
    """Kernel: (Np, H+2p, 2(W+2p)) column-duplicated input -> (Np, H, 4W) output.

    Output row block layout: o[:, r, 0:2W] = output row 2r, o[:, r, 2W:4W] = 2r+1;
    a row-major reshape to (2H, 2W) in the wrapper gives the interleaved image.
    """
    Wo = 2 * W
    hoff_items = tuple(sorted((off, (cw[0], cw[1])) for off, cw in hoff.items()))
    vtaps0 = tuple(vtaps[0])
    vtaps1 = tuple(vtaps[1])

    def kernel(x_ref, o_ref):
        x = x_ref[...].astype(jnp.float32)            # cast once; accumulate in f32
        n_pl, hr, _ = x.shape
        lane = jax.lax.broadcasted_iota(jnp.int32, (1, Wo), 1)
        even_lane = (lane % 2) == 0

        # --- horizontal (lane) pass: parity-masked shifted-slice MADs ---
        h = jnp.zeros((n_pl, hr, Wo), jnp.float32)
        for off, (we, wo) in hoff_items:
            coef = jnp.where(even_lane, jnp.float32(we), jnp.float32(wo))
            h = h + coef * x[:, :, off:off + Wo]

        # --- vertical (sublane) pass: one lane-dense slab per row parity ---
        for vt, lo in ((vtaps0, 0), (vtaps1, Wo)):
            acc = jnp.zeros((n_pl, H, Wo), jnp.float32)
            for r0, w in vt:
                acc = acc + jnp.float32(w) * h[:, r0:r0 + H, :]
            o_ref[:, :, lo:lo + Wo] = acc.astype(o_ref.dtype)

    return kernel


def upsample_forward(x, kernel_size: int = 4, factor: int = 2,
                     vmem_budget_bytes: int = 3 << 20):
    """Equivalent of Upsample(channels=C, kernel_size).forward(x) for NCHW x."""
    if factor != 2:
        raise NotImplementedError("Upsample module always uses up_factor=2")
    b, c, h, w = x.shape
    K = kernel_size
    pad, hoff, vtaps = _polyphase_plan(K, factor)

    bc = b * c
    hr = h + 2 * pad
    wr = 2 * (w + 2 * pad)

    # Compact prep in XLA: pad by `pad` pixels and duplicate each column once.
    # This replaces the 4x-larger zero-interleaved + padded intermediate of the
    # direct formulation.
    xp = jnp.pad(x.reshape(bc, h, w), ((0, 0), (pad, pad), (pad, pad)))
    xr = jnp.repeat(xp, 2, axis=2)                    # (bc, hr, wr)

    # Batch several planes per grid step under a VMEM budget; keep >= 2 grid
    # blocks when possible so both TensorCores (v7x megacore) get work.
    per_plane_bytes = 4 * (hr * wr + hr * 2 * w + h * 4 * w)
    cap = max(1, vmem_budget_bytes // per_plane_bytes)
    divisors = [d for d in range(1, bc + 1) if bc % d == 0 and d <= cap]
    preferred = [d for d in divisors if bc // d >= 2]
    n_planes = max(preferred) if preferred else max(divisors)
    grid = (bc // n_planes,)
    # TODO(synk): for very large planes (single plane exceeding the VMEM budget)
    # add row tiling with a `pad`-row halo instead of whole-plane blocks.

    out = pl.pallas_call(
        _make_upfirdn2x_kernel(hoff, vtaps, h, w),
        out_shape=jax.ShapeDtypeStruct((bc, h, 4 * w), x.dtype),
        grid=grid,
        in_specs=[pl.BlockSpec((n_planes, hr, wr), lambda i: (i, 0, 0))],
        out_specs=pl.BlockSpec((n_planes, h, 4 * w), lambda i: (i, 0, 0)),
        compiler_params=pltpu.CompilerParams(
            dimension_semantics=("parallel",),
            vmem_limit_bytes=32 * 1024 * 1024),
    )(xr)

    # (bc, H, 4W) with each row laid out as [even_row(2W) | odd_row(2W)] is
    # bit-identical, row-major, to (b, c, 2H, 2W): the interleave is free.
    return out.reshape(b, c, factor * h, factor * w)


def _reference(x, kernel_size: int = 4, factor: int = 2):
    """Pure-JAX reference mirroring the PyTorch module (for verification)."""
    b, c, h, w = x.shape
    K = kernel_size
    k2 = jnp.asarray(blur_kernel_2d(K) * float(factor ** 2), jnp.float32)
    pad = K - factor
    pad0 = (pad + 1) // 2 + factor - 1
    pad1 = pad // 2

    x_up = jnp.zeros((b, c, h * factor, w * factor), x.dtype)
    x_up = x_up.at[:, :, ::factor, ::factor].set(x)
    x_pad = jnp.pad(x_up, ((0, 0), (0, 0), (pad0, pad1), (pad0, pad1)))

    filt = jnp.tile(k2[None, None, :, :], (c, 1, 1, 1))  # (C, 1, K, K), groups=C
    return jax.lax.conv_general_dilated(
        x_pad, filt, window_strides=(1, 1), padding="VALID",
        dimension_numbers=("NCHW", "OIHW", "NCHW"),
        feature_group_count=c)


if __name__ == "__main__":
    key = jax.random.PRNGKey(0)
    B, C, H, W = 2, 4, 16, 16
    x = jax.random.normal(key, (B, C, H, W), dtype=jnp.float32)

    for K in (4, 3):  # default kernel_size=4, plus an odd size to exercise the planner
        out = jax.block_until_ready(upsample_forward(x, kernel_size=K, factor=2))
        ref = jax.block_until_ready(_reference(x, kernel_size=K, factor=2))
        assert out.shape == (B, C, 2 * H, 2 * W), out.shape
        np.testing.assert_allclose(np.asarray(out), np.asarray(ref),
                                   rtol=1e-5, atol=1e-5)

    print("KERNEL_OK")
</pallas_src>

<mosaic_0001>
module attributes {stable_mosaic.version = 11 : i64} {
  func.func @kernel(%arg0: i32, %arg1: memref<4x18x36xf32, #tpu.memory_space<vmem>>, %arg2: memref<4x16x64xf32, #tpu.memory_space<vmem>>) attributes {dimension_semantics = [#tpu.dimension_semantics<parallel>], iteration_bounds = array<i64: 2>, scalar_prefetch = 0 : i64, scratch_operands = 0 : i64, tpu.core_type = #tpu.core_type<tc>, window_params = [{transform_indices = @transform_0, window_bounds = array<i64: 4, 18, 36>}, {transform_indices = @transform_1, window_bounds = array<i64: 4, 16, 64>}]} {
    %c0 = arith.constant 0 : index
    %c0_0 = arith.constant 0 : index
    %c0_1 = arith.constant 0 : index
    %0 = vector.load %arg1[%c0, %c0_0, %c0_1] : memref<4x18x36xf32, #tpu.memory_space<vmem>>, vector<4x18x36xf32>
    %1 = tpu.iota {dimensions = array<i32: 1>} : vector<1x32xi32>
    %c2_i32 = arith.constant 2 : i32
    %c0_i32 = arith.constant 0 : i32
    %2 = arith.cmpi eq, %c2_i32, %c0_i32 : i32
    %c1_i32 = arith.constant 1 : i32
    %3 = arith.select %2, %c1_i32, %c2_i32 : i32
    %4 = vector.broadcast %3 : i32 to vector<1x32xi32>
    %5 = arith.remsi %1, %4 : vector<1x32xi32>
    %c0_i32_2 = arith.constant 0 : i32
    %6 = vector.broadcast %c0_i32_2 : i32 to vector<1x32xi32>
    %7 = arith.cmpi ne, %5, %6 : vector<1x32xi32>
    %c0_i32_3 = arith.constant 0 : i32
    %8 = vector.broadcast %c0_i32_3 : i32 to vector<1x32xi32>
    %9 = arith.cmpi slt, %5, %8 : vector<1x32xi32>
    %c0_i32_4 = arith.constant 0 : i32
    %10 = arith.cmpi slt, %3, %c0_i32_4 : i32
    %11 = vector.broadcast %10 : i1 to vector<1x32xi1>
    %12 = vector.broadcast %11 : vector<1x32xi1> to vector<1x32xi1>
    %13 = arith.xori %9, %12 : vector<1x32xi1>
    %14 = arith.andi %13, %7 : vector<1x32xi1>
    %15 = vector.broadcast %3 : i32 to vector<1x32xi32>
    %16 = arith.addi %5, %15 : vector<1x32xi32>
    %17 = arith.select %14, %16, %5 : vector<1x32xi1>, vector<1x32xi32>
    %c0_i32_5 = arith.constant 0 : i32
    %18 = vector.broadcast %c0_i32_5 : i32 to vector<1x32xi32>
    %19 = arith.cmpi eq, %17, %18 : vector<1x32xi32>
    %cst = arith.constant 0.000000e+00 : f32
    %20 = vector.broadcast %cst : f32 to vector<4x18x32xf32>
    %cst_6 = arith.constant 2.500000e-01 : f32
    %cst_7 = arith.constant 0.000000e+00 : f32
    %21 = vector.broadcast %cst_6 : f32 to vector<1x32xf32>
    %22 = vector.broadcast %cst_7 : f32 to vector<1x32xf32>
    %23 = arith.select %19, %21, %22 : vector<1x32xi1>, vector<1x32xf32>
    %24 = vector.extract_strided_slice %0 {offsets = [0, 0, 0], sizes = [4, 18, 32], strides = [1, 1, 1]} : vector<4x18x36xf32> to vector<4x18x32xf32>
    %25 = vector.shape_cast %23 : vector<1x32xf32> to vector<1x1x32xf32>
    %26 = vector.broadcast %25 : vector<1x1x32xf32> to vector<4x18x32xf32>
    %27 = arith.mulf %26, %24 : vector<4x18x32xf32>
    %28 = arith.addf %20, %27 : vector<4x18x32xf32>
    %cst_8 = arith.constant 7.500000e-01 : f32
    %cst_9 = arith.constant 7.500000e-01 : f32
    %29 = vector.broadcast %cst_8 : f32 to vector<1x32xf32>
    %30 = vector.broadcast %cst_9 : f32 to vector<1x32xf32>
    %31 = arith.select %19, %29, %30 : vector<1x32xi1>, vector<1x32xf32>
    %32 = vector.extract_strided_slice %0 {offsets = [0, 0, 2], sizes = [4, 18, 32], strides = [1, 1, 1]} : vector<4x18x36xf32> to vector<4x18x32xf32>
    %33 = vector.shape_cast %31 : vector<1x32xf32> to vector<1x1x32xf32>
    %34 = vector.broadcast %33 : vector<1x1x32xf32> to vector<4x18x32xf32>
    %35 = arith.mulf %34, %32 : vector<4x18x32xf32>
    %36 = arith.addf %28, %35 : vector<4x18x32xf32>
    %cst_10 = arith.constant 0.000000e+00 : f32
    %cst_11 = arith.constant 2.500000e-01 : f32
    %37 = vector.broadcast %cst_10 : f32 to vector<1x32xf32>
    %38 = vector.broadcast %cst_11 : f32 to vector<1x32xf32>
    %39 = arith.select %19, %37, %38 : vector<1x32xi1>, vector<1x32xf32>
    %40 = vector.extract_strided_slice %0 {offsets = [0, 0, 4], sizes = [4, 18, 32], strides = [1, 1, 1]} : vector<4x18x36xf32> to vector<4x18x32xf32>
    %41 = vector.shape_cast %39 : vector<1x32xf32> to vector<1x1x32xf32>
    %42 = vector.broadcast %41 : vector<1x1x32xf32> to vector<4x18x32xf32>
    %43 = arith.mulf %42, %40 : vector<4x18x32xf32>
    %44 = arith.addf %36, %43 : vector<4x18x32xf32>
    %cst_12 = arith.constant 0.000000e+00 : f32
    %45 = vector.broadcast %cst_12 : f32 to vector<4x16x32xf32>
    %46 = vector.extract_strided_slice %44 {offsets = [0, 0, 0], sizes = [4, 16, 32], strides = [1, 1, 1]} : vector<4x18x32xf32> to vector<4x16x32xf32>
    %cst_13 = arith.constant 2.500000e-01 : f32
    %47 = vector.broadcast %cst_13 : f32 to vector<4x16x32xf32>
    %48 = arith.mulf %47, %46 : vector<4x16x32xf32>
    %49 = arith.addf %45, %48 : vector<4x16x32xf32>
    %50 = vector.extract_strided_slice %44 {offsets = [0, 1, 0], sizes = [4, 16, 32], strides = [1, 1, 1]} : vector<4x18x32xf32> to vector<4x16x32xf32>
    %cst_14 = arith.constant 7.500000e-01 : f32
    %51 = vector.broadcast %cst_14 : f32 to vector<4x16x32xf32>
    %52 = arith.mulf %51, %50 : vector<4x16x32xf32>
    %53 = arith.addf %49, %52 : vector<4x16x32xf32>
    %c0_15 = arith.constant 0 : index
    %c0_16 = arith.constant 0 : index
    %c0_17 = arith.constant 0 : index
    %54 = vector.load %arg2[%c0_15, %c0_16, %c0_17] : memref<4x16x64xf32, #tpu.memory_space<vmem>>, vector<4x16x32xf32>
    tpu.vector_store %arg2[%c0_15, %c0_16, %c0_17], %53 {strides = array<i32>} : memref<4x16x64xf32, #tpu.memory_space<vmem>>, vector<4x16x32xf32>,
    %cst_18 = arith.constant 0.000000e+00 : f32
    %55 = vector.broadcast %cst_18 : f32 to vector<4x16x32xf32>
    %56 = vector.extract_strided_slice %44 {offsets = [0, 1, 0], sizes = [4, 16, 32], strides = [1, 1, 1]} : vector<4x18x32xf32> to vector<4x16x32xf32>
    %cst_19 = arith.constant 7.500000e-01 : f32
    %57 = vector.broadcast %cst_19 : f32 to vector<4x16x32xf32>
    %58 = arith.mulf %57, %56 : vector<4x16x32xf32>
    %59 = arith.addf %55, %58 : vector<4x16x32xf32>
    %60 = vector.extract_strided_slice %44 {offsets = [0, 2, 0], sizes = [4, 16, 32], strides = [1, 1, 1]} : vector<4x18x32xf32> to vector<4x16x32xf32>
    %cst_20 = arith.constant 2.500000e-01 : f32
    %61 = vector.broadcast %cst_20 : f32 to vector<4x16x32xf32>
    %62 = arith.mulf %61, %60 : vector<4x16x32xf32>
    %63 = arith.addf %59, %62 : vector<4x16x32xf32>
    %c0_21 = arith.constant 0 : index
    %c0_22 = arith.constant 0 : index
    %c32 = arith.constant 32 : index
    %64 = vector.load %arg2[%c0_21, %c0_22, %c32] : memref<4x16x64xf32, #tpu.memory_space<vmem>>, vector<4x16x32xf32>
    tpu.vector_store %arg2[%c0_21, %c0_22, %c32], %63 {strides = array<i32>} : memref<4x16x64xf32, #tpu.memory_space<vmem>>, vector<4x16x32xf32>,
    return
  }
  func.func @transform_0(%arg0: i32) -> (i32, i32, i32) {
    %c0_i32 = arith.constant 0 : i32
    %c0_i32_0 = arith.constant 0 : i32
    %c0_i32_1 = arith.constant 0 : i32
    return %arg0, %c0_i32, %c0_i32_0 : i32, i32, i32
  }
  func.func @transform_1(%arg0: i32) -> (i32, i32, i32) {
    %c0_i32 = arith.constant 0 : i32
    %c0_i32_0 = arith.constant 0 : i32
    %c0_i32_1 = arith.constant 0 : i32
    return %arg0, %c0_i32, %c0_i32_0 : i32, i32, i32
  }
}

</mosaic_0001>

<llo_original>
// kernel: tpu_custom_call.1
$region0: #{tpu_custom_call.1}
  #allocation0 [shape = 'u32[]', space=smem, size = 0x4, offset = 0x4, fixed_abs, tag = 'smem constant byte address 0x4 - core index']
  #allocation1 [shape = 'u32[144,128]{1,0:T(1,128)}', space=vmem, size = 0x12000, scoped, tag = 'internal scratch']
  %s0 = inlined_call_operand.vmem [shape: f32[8,18,36], index: 0, kind: input, shape index: {}]
  %s1 = inlined_call_operand.hbm [shape: f32[8,16,64], index: 1, kind: output, shape index: {}]
  %s2 = sld [smem:[#allocation0]]
  $region37: #{tpu_custom_call.1} parent=0
    _
  %s4 = ssub.s32 1, %s2
  %s5 = scalar_select 0, %s4, %s2
  $region1: #{tpu_custom_call.1} parent=0
    #allocation2 [shape = 'u8[65536]{0}', space=vmem, size = 0x10000, scoped, tag = 'output window, operand 0']
    #allocation3 [shape = 's32[2]{0}', space=sflag, size = 0x8, scoped, tag = 'scoped memory for tpu_custom_call.1']
    %6 = vsyncpa [#allocation3], 0
    %s7 = scalar_lea.sflag [#allocation3], 1
    %8 = vsyncpa %s7, 0
    loop: start=0, step=1, limit=4
    $region2: #{tpu_custom_call.1} parent=1 // loop_pre_header
      _
    $region3: #{tpu_custom_call.1} parent=1 // loop_header
      %s10 = sphi 0, %s14
      %p11 = scmp.ge.s32.totalorder %s10, 4
      %s20 = sphi 0, %s22
      %s23 = sphi 0, %s20
      %s24 = sphi 0, %s23
      %s40 = sphi 0, %s24
      %s46 = sphi 0, %s48
      %s49 = sphi 0, %s46
      %s50 = sphi 0, %s49
      %s66 = sphi 0, %s50
    $region4: #{tpu_custom_call.1} parent=1 // loop_header_branch
      %13 = sbr.rel (%p11) target = $region8
    $region5: #{tpu_custom_call.1} parent=1 // loop_body
      %s15 = ssub.s32 %s10, 1
      %s16 = ssub.s32 %s10, 2
      %s17 = sadd.s32 %s10, 1
      %s18 = ssub.s32 %s10, %s17
      %p19 = scmp.eq.s32.totalorder %s18, 0
      %s21 = sadd.s32 %s20, 1
      %s22 = scalar_select %p19, %s20, %s21
      %p25 = pneg %p19
      %p26 = scmp.eq.s32.totalorder %s10, 1
      %p27 = por %p25, %p26
      %p28 = scmp.ne.s32.totalorder %s20, %s23
      %p29 = scmp.eq.s32.totalorder %s10, 0
      %p30 = por %p28, %p29
      %p31 = scmp.ne.s32.totalorder %s20, %s23
      %p32 = scmp.eq.s32.totalorder %s15, 1
      %p33 = por %p31, %p32
      %p34 = scmp.ne.s32.totalorder %s23, %s24
      %p35 = scmp.eq.s32.totalorder %s15, 0
      %p36 = por %p34, %p35
      %p37 = scmp.ne.s32.totalorder %s23, %s24
      %p38 = scmp.eq.s32.totalorder %s16, 1
      %p39 = por %p37, %p38
      %p41 = scmp.ne.s32.totalorder %s24, %s40
      %p42 = scmp.eq.s32.totalorder %s16, 0
      %p43 = por %p41, %p42
      %s44 = ssub.s32 %s10, %s17
      %p45 = scmp.eq.s32.totalorder %s44, 0
      %s47 = sadd.s32 %s46, 1
      %s48 = scalar_select %p45, %s46, %s47
      %p51 = pneg %p45
      %p52 = scmp.eq.s32.totalorder %s10, 1
      %p53 = por %p51, %p52
      %p54 = scmp.ne.s32.totalorder %s46, %s49
      %p55 = scmp.eq.s32.totalorder %s10, 0
      %p56 = por %p54, %p55
      %p57 = scmp.ne.s32.totalorder %s46, %s49
      %p58 = scmp.eq.s32.totalorder %s15, 1
      %p59 = por %p57, %p58
      %p60 = scmp.ne.s32.totalorder %s49, %s50
      %p61 = scmp.eq.s32.totalorder %s15, 0
      %p62 = por %p60, %p61
      %p63 = scmp.ne.s32.totalorder %s49, %s50
      %p64 = scmp.eq.s32.totalorder %s16, 1
      %p65 = por %p63, %p64
      %p67 = scmp.ne.s32.totalorder %s50, %s66
      %p68 = scmp.eq.s32.totalorder %s16, 0
      %p69 = por %p67, %p68
      %p70 = scmp.le.s32.totalorder 1, %s10
      %p71 = scmp.lt.s32.totalorder %s10, 3
      %p72 = pnand %p70, %p71
      %p73 = pneg %p72
      // Predicated region
      $region9: #{tpu_custom_call.1} parent=5 // pred_check
        _
      $region10: #{tpu_custom_call.1} parent=5 // pred_check_branch
        %75 = sbr.rel (%p72) target = $region12
      $region11: #{tpu_custom_call.1} parent=5 // pred_region
        %s76 = ssub.s32 %s10, 1
      $region12: #{tpu_custom_call.1} parent=5 // pred_fallthru
        _
      %p77 = scmp.lt.s32.totalorder %s10, 2
      // Predicated region
      $region13: #{tpu_custom_call.1} parent=5 // pred_check
        %p78 = pneg %p77
      $region14: #{tpu_custom_call.1} parent=5 // pred_check_branch
        %80 = sbr.rel (%p78) target = $region16
      $region15: #{tpu_custom_call.1} parent=5 // pred_region
        // Predicated region
        $region17: #{tpu_custom_call.1} parent=15 // pred_check
          %p81 = pneg %p30
        $region18: #{tpu_custom_call.1} parent=15 // pred_check_branch
          %83 = sbr.rel (%p81) target = $region20
        $region19: #{tpu_custom_call.1} parent=15 // pred_region
          %s84 = smul.u32 4, %s10
          %p85 = scmp.lt.s32.totalorder %s84, 7
          %s86 = scalar_select %p85, %s84, 7
          %s87 = smul.addr %s86, 3
          %s88 = smul.addr %s87, 8
          %s89 = scalar_lea.vmem %s0, %s88
          %s90 = smul.u32 4, %s10
        $region20: #{tpu_custom_call.1} parent=15 // pred_fallthru
          _
      $region16: #{tpu_custom_call.1} parent=5 // pred_fallthru
        _
      %p91 = scmp.le.s32.totalorder 1, %s10
      %p92 = scmp.lt.s32.totalorder %s10, 3
      %p93 = pnand %p91, %p92
      %p94 = pneg %p93
      // Predicated region
      $region21: #{tpu_custom_call.1} parent=5 // pred_check
        _
      $region22: #{tpu_custom_call.1} parent=5 // pred_check_branch
        %96 = sbr.rel (%p93) target = $region24
      $region23: #{tpu_custom_call.1} parent=5 // pred_region
        %s97 = ssub.s32 %s10, 1
        %s98 = smul.u32 4, %s15
        %p99 = scmp.lt.s32.totalorder %s98, 7
        %s100 = scalar_select %p99, %s98, 7
        %s101 = smul.addr %s100, 3
        %s102 = smul.addr %s101, 8
        %s103 = scalar_lea.vmem %s0, %s102
        %p104 = pneg %p36
        %p105 = pneg %p33
        %p106 = pneg %p62
        %p107 = pneg %p59
        %s108 = sand.u32 %s49, 1
        %s109 = scalar_lea.sflag [#allocation3], %s108
        %s110 = sand.u32 %s49, 1
        %s111 = smul.addr %s110, 64
        %s112 = scalar_lea.vmem [#allocation2], %s111
        %s113 = smul.u32 4, %s15
        %p114 = scmp.lt.s32.totalorder %s113, 7
        %s115 = scalar_select %p114, %s113, 7
        %s116 = smul.addr %s115, 3
        %s117 = smul.addr %s116, 8
        %s118 = scalar_lea.vmem %s0, %s117
        %s119 = smul.u32 4, %s15
        %s120 = smul.u32 4, %s15
        %v121 = vld [vmem:[%s118] sm:$0xff]
        %v122 = vld [vmem:[%s118 + $0x8] sm:$0xff]
        %v123 = vld [vmem:[%s118 + $0x10] sm:$0x3]
        %v124 = vld [vmem:[%s118 + $0x18] sm:$0xff]
        %v125 = vld [vmem:[%s118 + $0x20] sm:$0xff]
        %v126 = vld [vmem:[%s118 + $0x28] sm:$0x3]
        %v127 = vld [vmem:[%s118 + $0x30] sm:$0xff]
        %v128 = vld [vmem:[%s118 + $0x38] sm:$0xff]
        %v129 = vld [vmem:[%s118 + $0x40] sm:$0x3]
        %v130 = vld [vmem:[%s118 + $0x48] sm:$0xff]
        %v131 = vld [vmem:[%s118 + $0x50] sm:$0xff]
        %v132 = vld [vmem:[%s118 + $0x58] sm:$0x3]
        %v133 = vlaneseq
        %v134 = vand.u32 %v133, 127
        %vm135 = vcmp.lt.s32.totalorder %v134, 0
        %v136 = vsub.s32 0, %v134
        %v137 = vsel %vm135, %v136, %v134
        %v138 = vshrl.u32 %v137, 1
        %v139 = vand.u32 %v137, 1
        %v140 = vsub.s32 0, %v139
        %v141 = vsel %vm135, %v140, %v139
        %vm142 = vcmp.ne.s32.totalorder %v141, 0
        %vm143 = vcmp.lt.s32.totalorder %v141, 0
        %vm144 = vmand %vm143, %vm142
        %v145 = vadd.s32 %v141, 2
        %v146 = vsel %vm144, %v145, %v141
        %vm147 = vcmp.eq.s32.totalorder %v146, 0
        %v148 = vsel %vm147, 0.25, 0.0
        %v149 = vmul.f32 %v148, %v121
        %v150 = vmul.f32 %v148, %v122
        %v151 = vmul.f32 %v148, %v123
        %v152 = vmul.f32 %v148, %v124
        %v153 = vmul.f32 %v148, %v125
        %v154 = vmul.f32 %v148, %v126
        %v155 = vmul.f32 %v148, %v127
        %v156 = vmul.f32 %v148, %v128
        %v157 = vmul.f32 %v148, %v129
        %v158 = vmul.f32 %v148, %v130
        %v159 = vmul.f32 %v148, %v131
        %v160 = vmul.f32 %v148, %v132
        %v161 = vadd.f32 %v149, 0.0
        %v162 = vadd.f32 %v150, 0.0
        %v163 = vadd.f32 %v151, 0.0
        %v164 = vadd.f32 %v152, 0.0
        %v165 = vadd.f32 %v153, 0.0
        %v166 = vadd.f32 %v154, 0.0
        %v167 = vadd.f32 %v155, 0.0
        %v168 = vadd.f32 %v156, 0.0
        %v169 = vadd.f32 %v157, 0.0
        %v170 = vadd.f32 %v158, 0.0
        %v171 = vadd.f32 %v159, 0.0
        %v172 = vadd.f32 %v160, 0.0
        %v173 = vmul.f32 %v121, 0.75
        %v174 = vmul.f32 %v122, 0.75
        %v175 = vmul.f32 %v123, 0.75
        %v176 = vmul.f32 %v124, 0.75
        %v177 = vmul.f32 %v125, 0.75
        %v178 = vmul.f32 %v126, 0.75
        %v179 = vmul.f32 %v127, 0.75
        %v180 = vmul.f32 %v128, 0.75
        %v181 = vmul.f32 %v129, 0.75
        %v182 = vmul.f32 %v130, 0.75
        %v183 = vmul.f32 %v131, 0.75
        %v184 = vmul.f32 %v132, 0.75
        %197 = vrot.lane.b32.xlu0 %v173, 126
        %v198 = vpop.permute.xlu0 %197
        %199 = vrot.lane.b32.xlu0 %v174, 126
        %v200 = vpop.permute.xlu0 %199
        %201 = vrot.lane.b32.xlu0 %v175, 126
        %v202 = vpop.permute.xlu0 %201
        %203 = vrot.lane.b32.xlu0 %v176, 126
        %v204 = vpop.permute.xlu0 %203
        %205 = vrot.lane.b32.xlu0 %v177, 126
        %v206 = vpop.permute.xlu0 %205
        %207 = vrot.lane.b32.xlu0 %v178, 126
        %v208 = vpop.permute.xlu0 %207
        %209 = vrot.lane.b32.xlu0 %v179, 126
        %v210 = vpop.permute.xlu0 %209
        %211 = vrot.lane.b32.xlu0 %v180, 126
        %v212 = vpop.permute.xlu0 %211
        %213 = vrot.lane.b32.xlu0 %v181, 126
        %v214 = vpop.permute.xlu0 %213
        %215 = vrot.lane.b32.xlu0 %v182, 126
        %v216 = vpop.permute.xlu0 %215
        %217 = vrot.lane.b32.xlu0 %v183, 126
        %v218 = vpop.permute.xlu0 %217
        %219 = vrot.lane.b32.xlu0 %v184, 126
        %v220 = vpop.permute.xlu0 %219
        %v233 = vadd.f32 %v161, %v198
        %v234 = vadd.f32 %v162, %v200
        %v235 = vadd.f32 %v163, %v202
        %v236 = vadd.f32 %v164, %v204
        %v237 = vadd.f32 %v165, %v206
        %v238 = vadd.f32 %v166, %v208
        %v239 = vadd.f32 %v167, %v210
        %v240 = vadd.f32 %v168, %v212
        %v241 = vadd.f32 %v169, %v214
        %v242 = vadd.f32 %v170, %v216
        %v243 = vadd.f32 %v171, %v218
        %v244 = vadd.f32 %v172, %v220
        %v245 = vsel %vm147, 0.0, 0.25
        %258 = vrot.lane.b32.xlu0 %v121, 124
        %v259 = vpop.permute.xlu0 %258
        %260 = vrot.lane.b32.xlu0 %v122, 124
        %v261 = vpop.permute.xlu0 %260
        %262 = vrot.lane.b32.xlu0 %v123, 124
        %v263 = vpop.permute.xlu0 %262
        %264 = vrot.lane.b32.xlu0 %v124, 124
        %v265 = vpop.permute.xlu0 %264
        %266 = vrot.lane.b32.xlu0 %v125, 124
        %v267 = vpop.permute.xlu0 %266
        %268 = vrot.lane.b32.xlu0 %v126, 124
        %v269 = vpop.permute.xlu0 %268
        %270 = vrot.lane.b32.xlu0 %v127, 124
        %v271 = vpop.permute.xlu0 %270
        %272 = vrot.lane.b32.xlu0 %v128, 124
        %v273 = vpop.permute.xlu0 %272
        %274 = vrot.lane.b32.xlu0 %v129, 124
        %v275 = vpop.permute.xlu0 %274
        %276 = vrot.lane.b32.xlu0 %v130, 124
        %v277 = vpop.permute.xlu0 %276
        %278 = vrot.lane.b32.xlu0 %v131, 124
        %v279 = vpop.permute.xlu0 %278
        %280 = vrot.lane.b32.xlu0 %v132, 124
        %v281 = vpop.permute.xlu0 %280
        %v294 = vmul.f32 %v245, %v259
        %v295 = vmul.f32 %v245, %v261
        %v296 = vmul.f32 %v245, %v263
        %v297 = vmul.f32 %v245, %v265
        %v298 = vmul.f32 %v245, %v267
        %v299 = vmul.f32 %v245, %v269
        %v300 = vmul.f32 %v245, %v271
        %v301 = vmul.f32 %v245, %v273
        %v302 = vmul.f32 %v245, %v275
        %v303 = vmul.f32 %v245, %v277
        %v304 = vmul.f32 %v245, %v279
        %v305 = vmul.f32 %v245, %v281
        %v306 = vadd.f32 %v233, %v294
        %v307 = vadd.f32 %v234, %v295
        %v308 = vadd.f32 %v235, %v296
        %v309 = vadd.f32 %v236, %v297
        %v310 = vadd.f32 %v237, %v298
        %v311 = vadd.f32 %v238, %v299
        %v312 = vadd.f32 %v239, %v300
        %v313 = vadd.f32 %v240, %v301
        %v314 = vadd.f32 %v241, %v302
        %v315 = vadd.f32 %v242, %v303
        %v316 = vadd.f32 %v243, %v304
        %v317 = vadd.f32 %v244, %v305
        %v318 = vmul.f32 %v306, 0.25
        %v319 = vmul.f32 %v307, 0.25
        %v320 = vmul.f32 %v309, 0.25
        %v321 = vmul.f32 %v310, 0.25
        %v322 = vmul.f32 %v312, 0.25
        %v323 = vmul.f32 %v313, 0.25
        %v324 = vmul.f32 %v315, 0.25
        %v325 = vmul.f32 %v316, 0.25
        %v326 = vadd.f32 %v318, 0.0
        %v327 = vadd.f32 %v319, 0.0
        %v328 = vadd.f32 %v320, 0.0
        %v329 = vadd.f32 %v321, 0.0
        %v330 = vadd.f32 %v322, 0.0
        %v331 = vadd.f32 %v323, 0.0
        %v332 = vadd.f32 %v324, 0.0
        %v333 = vadd.f32 %v325, 0.0
        %v334 = vmul.f32 %v306, 0.75
        %v335 = vmul.f32 %v307, 0.75
        %v336 = vmul.f32 %v308, 0.75
        %v337 = vmul.f32 %v309, 0.75
        %v338 = vmul.f32 %v310, 0.75
        %v339 = vmul.f32 %v311, 0.75
        %v340 = vmul.f32 %v312, 0.75
        %v341 = vmul.f32 %v313, 0.75
        %v342 = vmul.f32 %v314, 0.75
        %v343 = vmul.f32 %v315, 0.75
        %v344 = vmul.f32 %v316, 0.75
        %v345 = vmul.f32 %v317, 0.75
        %vm358 = vcmask 1046528
        %v359 = vrot.slane %v334, 1
        %v360 = vrot.slane %v335, 1
        %v361 = vsel %vm358, %v359, %v360
        %v362 = vrot.slane %v336, 1
        %v363 = vsel %vm358, %v360, %v362
        %v364 = vrot.slane %v337, 1
        %v365 = vrot.slane %v338, 1
        %v366 = vsel %vm358, %v364, %v365
        %v367 = vrot.slane %v339, 1
        %v368 = vsel %vm358, %v365, %v367
        %v369 = vrot.slane %v340, 1
        %v370 = vrot.slane %v341, 1
        %v371 = vsel %vm358, %v369, %v370
        %v372 = vrot.slane %v342, 1
        %v373 = vsel %vm358, %v370, %v372
        %v374 = vrot.slane %v343, 1
        %v375 = vrot.slane %v344, 1
        %v376 = vsel %vm358, %v374, %v375
        %v377 = vrot.slane %v345, 1
        %v378 = vsel %vm358, %v375, %v377
        %v387 = vadd.f32 %v326, %v361
        %v388 = vadd.f32 %v327, %v363
        %v389 = vadd.f32 %v328, %v366
        %v390 = vadd.f32 %v329, %v368
        %v391 = vadd.f32 %v330, %v371
        %v392 = vadd.f32 %v331, %v373
        %v393 = vadd.f32 %v332, %v376
        %v394 = vadd.f32 %v333, %v378
        %vm395 = vcmask 261120
        %396 = vst.msk [vmem:[%s112] sm:$0xff] %vm395, %v387
        %397 = vst.msk [vmem:[%s112 + $0x8] sm:$0xff] %vm395, %v388
        %398 = vst.msk [vmem:[%s112 + $0x10] sm:$0xff] %vm395, %v389
        %399 = vst.msk [vmem:[%s112 + $0x18] sm:$0xff] %vm395, %v390
        %400 = vst.msk [vmem:[%s112 + $0x20] sm:$0xff] %vm395, %v391
        %401 = vst.msk [vmem:[%s112 + $0x28] sm:$0xff] %vm395, %v392
        %402 = vst.msk [vmem:[%s112 + $0x30] sm:$0xff] %vm395, %v393
        %403 = vst.msk [vmem:[%s112 + $0x38] sm:$0xff] %vm395, %v394
        %v404 = vadd.f32 %v334, 0.0
        %v405 = vadd.f32 %v335, 0.0
        %v406 = vadd.f32 %v336, 0.0
        %v407 = vadd.f32 %v337, 0.0
        %v408 = vadd.f32 %v338, 0.0
        %v409 = vadd.f32 %v339, 0.0
        %v410 = vadd.f32 %v340, 0.0
        %v411 = vadd.f32 %v341, 0.0
        %v412 = vadd.f32 %v342, 0.0
        %v413 = vadd.f32 %v343, 0.0
        %v414 = vadd.f32 %v344, 0.0
        %v415 = vadd.f32 %v345, 0.0
        %v416 = vmul.f32 %v308, 0.25
        %v417 = vmul.f32 %v311, 0.25
        %v418 = vmul.f32 %v314, 0.25
        %v419 = vmul.f32 %v317, 0.25
        %v432 = vrot.slane %v318, 1
        %v433 = vrot.slane %v319, 1
        %v434 = vsel %vm358, %v432, %v433
        %v435 = vrot.slane %v416, 1
        %v436 = vsel %vm358, %v433, %v435
        %v437 = vrot.slane %v320, 1
        %v438 = vrot.slane %v321, 1
        %v439 = vsel %vm358, %v437, %v438
        %v440 = vrot.slane %v417, 1
        %v441 = vsel %vm358, %v438, %v440
        %v442 = vrot.slane %v322, 1
        %v443 = vrot.slane %v323, 1
        %v444 = vsel %vm358, %v442, %v443
        %v445 = vrot.slane %v418, 1
        %v446 = vsel %vm358, %v443, %v445
        %v447 = vrot.slane %v324, 1
        %v448 = vrot.slane %v325, 1
        %v449 = vsel %vm358, %v447, %v448
        %v450 = vrot.slane %v419, 1
        %v451 = vsel %vm358, %v448, %v450
        %v464 = vadd.f32 %v404, %v434
        %v465 = vadd.f32 %v405, %v436
        %v466 = vadd.f32 %v406, %v435
        %v467 = vadd.f32 %v407, %v439
        %v468 = vadd.f32 %v408, %v441
        %v469 = vadd.f32 %v409, %v440
        %v470 = vadd.f32 %v410, %v444
        %v471 = vadd.f32 %v411, %v446
        %v472 = vadd.f32 %v412, %v445
        %v473 = vadd.f32 %v413, %v449
        %v474 = vadd.f32 %v414, %v451
        %v475 = vadd.f32 %v415, %v450
        %488 = vrot.lane.b32.xlu0 %v464, 32
        %v489 = vpop.permute.xlu0 %488
        %490 = vrot.lane.b32.xlu0 %v465, 32
        %v491 = vpop.permute.xlu0 %490
        %492 = vrot.lane.b32.xlu0 %v466, 32
        %v493 = vpop.permute.xlu0 %492
        %494 = vrot.lane.b32.xlu0 %v467, 32
        %v495 = vpop.permute.xlu0 %494
        %496 = vrot.lane.b32.xlu0 %v468, 32
        %v497 = vpop.permute.xlu0 %496
        %498 = vrot.lane.b32.xlu0 %v469, 32
        %v499 = vpop.permute.xlu0 %498
        %500 = vrot.lane.b32.xlu0 %v470, 32
        %v501 = vpop.permute.xlu0 %500
        %502 = vrot.lane.b32.xlu0 %v471, 32
        %v503 = vpop.permute.xlu0 %502
        %504 = vrot.lane.b32.xlu0 %v472, 32
        %v505 = vpop.permute.xlu0 %504
        %506 = vrot.lane.b32.xlu0 %v473, 32
        %v507 = vpop.permute.xlu0 %506
        %508 = vrot.lane.b32.xlu0 %v474, 32
        %v509 = vpop.permute.xlu0 %508
        %510 = vrot.lane.b32.xlu0 %v475, 32
        %v511 = vpop.permute.xlu0 %510
        %vm524 = vcmask 523521
        %525 = vst.msk [vmem:[%s112 - $0x1] sm:$0xfe] %vm524, %v489
        %vm526 = vcmask 523520
        %527 = vst.msk [vmem:[%s112 + $0x7] sm:$0xff] %vm526, %v491
        %vm528 = vcmask 516352
        %529 = vst.msk [vmem:[%s112 + $0xf] sm:$0x1] %vm528, %v493
        %530 = vst.msk [vmem:[%s112 + $0xf] sm:$0xfe] %vm524, %v495
        %531 = vst.msk [vmem:[%s112 + $0x17] sm:$0xff] %vm526, %v497
        %532 = vst.msk [vmem:[%s112 + $0x1f] sm:$0x1] %vm528, %v499
        %533 = vst.msk [vmem:[%s112 + $0x1f] sm:$0xfe] %vm524, %v501
        %534 = vst.msk [vmem:[%s112 + $0x27] sm:$0xff] %vm526, %v503
        %535 = vst.msk [vmem:[%s112 + $0x2f] sm:$0x1] %vm528, %v505
        %536 = vst.msk [vmem:[%s112 + $0x2f] sm:$0xfe] %vm524, %v507
        %537 = vst.msk [vmem:[%s112 + $0x37] sm:$0xff] %vm526, %v509
        %538 = vst.msk [vmem:[%s112 + $0x3f] sm:$0x1] %vm528, %v511
        %s539 = sand.u32 %s49, 1
        %s540 = scalar_lea.sflag [#allocation3], %s539
        %s541 = sand.u32 %s49, 1
        %s542 = smul.addr %s541, 64
        %s543 = scalar_lea.vmem [#allocation2], %s542
        // Predicated region
        $region25: #{tpu_custom_call.1} parent=23 // pred_check
          %p544 = pneg %p59
        $region26: #{tpu_custom_call.1} parent=23 // pred_check_branch
          %546 = sbr.rel (%p544) target = $region28
        $region27: #{tpu_custom_call.1} parent=23 // pred_region
          %s547 = smul.u32 4, %s15
          %s549 = ssub.s32 1024, 1024
          %550 = vsyncadd %s540, %s549
          %s551 = smul.addr %s547, 2
          %s552 = smul.addr %s551, 128
          %s553 = scalar_lea.hbm %s1, %s552
          %s554 = sshll.u32 %s543, 4
          %s555 = int_to_ptr.vmem [resolvable:$true] %s554
          %560 = dma.vmem_to_hbm [thread:$0]  %s555, 1024, %s553, %s540, 128, 128, 8
        $region28: #{tpu_custom_call.1} parent=23 // pred_fallthru
          _
      $region24: #{tpu_custom_call.1} parent=5 // pred_fallthru
        _
      %p561 = scmp.le.s32.totalorder 2, %s10
      // Predicated region
      $region29: #{tpu_custom_call.1} parent=5 // pred_check
        %p562 = pneg %p561
      $region30: #{tpu_custom_call.1} parent=5 // pred_check_branch
        %564 = sbr.rel (%p562) target = $region32
      $region31: #{tpu_custom_call.1} parent=5 // pred_region
        %s565 = ssub.s32 %s10, 2
        // Predicated region
        $region33: #{tpu_custom_call.1} parent=31 // pred_check
          %p566 = pneg %p65
        $region34: #{tpu_custom_call.1} parent=31 // pred_check_branch
          %568 = sbr.rel (%p566) target = $region36
        $region35: #{tpu_custom_call.1} parent=31 // pred_region
          %s569 = sand.u32 %s50, 1
          %s570 = scalar_lea.sflag [#allocation3], %s569
          %s571 = sand.u32 %s50, 1
          %s572 = smul.addr %s571, 64
          %s573 = scalar_lea.vmem [#allocation2], %s572
          %574 = dma.done %s570, 1024
        $region36: #{tpu_custom_call.1} parent=31 // pred_fallthru
          _
      $region32: #{tpu_custom_call.1} parent=5 // pred_fallthru
        _
    $region6: #{tpu_custom_call.1} parent=1 // loop_footer
      %s14 = sadd.s32 1, %s10
    $region7: #{tpu_custom_call.1} parent=1 // loop_footer_branch
      %9 = sbr.rel target = $region3
    $region8: #{tpu_custom_call.1} parent=1 // loop_exit
      _
    %575 = vsyncpa [#allocation3], 1
    %s576 = scalar_lea.sflag [#allocation3], 1
    %577 = vsyncpa %s576, 1

</llo_original>
